<compile_context>
chip_gen: v7x
topology: tpu7x:2x2x1
jax: 0.10.0
libtpu: 0.0.40
codegen_flags: <defaults>
</compile_context>

<pallas_src>
import jax
import jax.numpy as jnp
from jax.experimental import pallas as pl
from jax.experimental.pallas import tpu as pltpu

LAYER_SIZES = [6, 16, 32, 64, 32, 16, 2]
NUM_LAYERS = len(LAYER_SIZES) - 1          # 6 linear layers
MAX_F = 64                                 # widest layer; weight stack padded to this
LANE = 128
SUBLANE_BF16 = 16                          # bf16 sublane tile


def _mlp_kernel(x_ref, w_ref, b_ref, o_ref):
    """One batch tile of the full MLP: x_ref (6, TB) bf16 -> o_ref (2, TB) f32.

    w_ref: (6, 64, 64) bf16, layer l weight stored (out, in), zero padded.
    b_ref: (6, 64, 1)  f32,  zero padded.
    """
    h = x_ref[...]                                             # (6, TB) bf16

    for l in range(NUM_LAYERS):
        fan_in = LAYER_SIZES[l]
        fan_out = LAYER_SIZES[l + 1]
        out_p = max(SUBLANE_BF16, fan_out)                     # 16,32,64,32,16,16

        w = w_ref[l, :out_p, :fan_in]                          # (out_p, fan_in) bf16
        b = b_ref[l, :out_p]                                   # (out_p, 1) f32
        y = jnp.dot(w, h, preferred_element_type=jnp.float32) + b   # (out_p, TB) f32

        if l < NUM_LAYERS - 1:
            # f32 ReLU, bf16 handoff to the next layer's MXU input.
            h = jnp.maximum(y, 0.0).astype(jnp.bfloat16)
        else:
            # Final layer: keep only the 2 real output rows, sigmoid in f32.
            y = y[:fan_out, :]                                 # (2, TB)
            o_ref[...] = jax.nn.sigmoid(y).astype(o_ref.dtype)


def pack_params(params):
    """Pack 6 (W, b) pairs into a zero-padded bf16 (out, in) weight stack + f32 bias stack."""
    w_stack = jnp.zeros((NUM_LAYERS, MAX_F, MAX_F), jnp.bfloat16)
    b_stack = jnp.zeros((NUM_LAYERS, MAX_F, 1), jnp.float32)
    for l, (w, b) in enumerate(params):        # w: (in, out)
        fan_in, fan_out = w.shape
        w_stack = w_stack.at[l, :fan_out, :fan_in].set(w.T.astype(jnp.bfloat16))
        b_stack = b_stack.at[l, :fan_out, 0].set(b.astype(jnp.float32))
    return w_stack, b_stack


def navigation_net_forward(x, params, *, tile_b=8192):
    """x: (B, 6) float32; params: list of (W(in,out), b(out,)). Returns (B, 2) f32."""
    B = x.shape[0]

    # Lane-aligned batch tile; pad batch so every grid step is a full tile.
    b_lanes = pl.cdiv(B, LANE) * LANE
    tb = min(int(tile_b), int(b_lanes))
    # Keep >=2 grid steps when the batch allows it (v7x: 2 TCs share the grid).
    if b_lanes >= 2 * LANE:
        tb = min(tb, (b_lanes // 2 // LANE) * LANE)
    tb = max(LANE, (tb // LANE) * LANE)
    b_pad = pl.cdiv(b_lanes, tb) * tb
    grid = (b_pad // tb,)

    w_stack, b_stack = pack_params(params)

    # Feature-major, zero-padded, bf16 input slab: (6, b_pad).
    x_t = jnp.pad(x.astype(jnp.bfloat16).T, ((0, 0), (0, b_pad - B)))

    out_t = pl.pallas_call(
        _mlp_kernel,
        out_shape=jax.ShapeDtypeStruct((LAYER_SIZES[-1], b_pad), jnp.float32),
        grid=grid,
        in_specs=[
            pl.BlockSpec((LAYER_SIZES[0], tb), lambda i: (0, i)),            # x tile
            pl.BlockSpec((NUM_LAYERS, MAX_F, MAX_F), lambda i: (0, 0, 0)),   # weights (resident)
            pl.BlockSpec((NUM_LAYERS, MAX_F, 1), lambda i: (0, 0, 0)),       # biases (resident)
        ],
        out_specs=pl.BlockSpec((LAYER_SIZES[-1], tb), lambda i: (0, i)),
        compiler_params=pltpu.CompilerParams(
            dimension_semantics=("parallel",)),
    )(x_t, w_stack, b_stack)

    return out_t[:, :B].T


def init_params(key):
    """Deterministic init mimicking torch.nn.Linear default U(-1/sqrt(in), 1/sqrt(in))."""
    params = []
    for fan_in, fan_out in zip(LAYER_SIZES[:-1], LAYER_SIZES[1:]):
        key, kw, kb = jax.random.split(key, 3)
        bound = 1.0 / jnp.sqrt(float(fan_in))
        w = jax.random.uniform(kw, (fan_in, fan_out), jnp.float32, -bound, bound)
        b = jax.random.uniform(kb, (fan_out,), jnp.float32, -bound, bound)
        params.append((w, b))
    return params


def reference_forward(x, params):
    h = x
    for i, (w, b) in enumerate(params):
        h = h @ w + b
        if i < len(params) - 1:
            h = jnp.maximum(h, 0.0)
        else:
            h = jax.nn.sigmoid(h)
    return h


if __name__ == "__main__":
    key = jax.random.PRNGKey(0)
    key, kx = jax.random.split(key)

    batch = 8
    x = jax.random.normal(kx, (batch, LAYER_SIZES[0]), jnp.float32)
    params = init_params(key)

    out = navigation_net_forward(x, params)
    out = jax.block_until_ready(out)

    # Reference sees the same bf16-rounded inputs/weights the kernel consumes
    # (kernel additionally carries bf16 activations between layers).
    x_eff = x.astype(jnp.bfloat16).astype(jnp.float32)
    params_eff = [(w.astype(jnp.bfloat16).astype(jnp.float32), b) for w, b in params]
    ref = reference_forward(x_eff, params_eff)

    assert out.shape == (batch, LAYER_SIZES[-1]), out.shape
    err = float(jnp.max(jnp.abs(out - ref)))
    assert err < 1e-2, f"max abs err = {err}"  # bf16 activation-carry bound

    print("KERNEL_OK")
</pallas_src>

<mosaic_0001>
module attributes {stable_mosaic.version = 11 : i64} {
  func.func @_mlp_kernel(%arg0: i32, %arg1: memref<6x128xbf16, #tpu.memory_space<vmem>>, %arg2: memref<6x64x64xbf16, #tpu.memory_space<vmem>>, %arg3: memref<6x64x1xf32, #tpu.memory_space<vmem>>, %arg4: memref<2x128xf32, #tpu.memory_space<vmem>>) attributes {dimension_semantics = [#tpu.dimension_semantics<parallel>], iteration_bounds = array<i64: 1>, scalar_prefetch = 0 : i64, scratch_operands = 0 : i64, tpu.core_type = #tpu.core_type<tc>, window_params = [{transform_indices = @transform_0, window_bounds = array<i64: 6, 128>}, {pipeline_mode = #tpu.pipeline_mode<synchronous>, transform_indices = @transform_1, window_bounds = array<i64: 6, 64, 64>}, {pipeline_mode = #tpu.pipeline_mode<synchronous>, transform_indices = @transform_2, window_bounds = array<i64: 6, 64, 1>}, {transform_indices = @transform_3, window_bounds = array<i64: 2, 128>}]} {
    %c0 = arith.constant 0 : index
    %c0_0 = arith.constant 0 : index
    %0 = vector.load %arg1[%c0, %c0_0] : memref<6x128xbf16, #tpu.memory_space<vmem>>, vector<6x128xbf16>
    %c0_1 = arith.constant 0 : index
    %c0_2 = arith.constant 0 : index
    %c0_3 = arith.constant 0 : index
    %1 = vector.load %arg2[%c0_1, %c0_2, %c0_3] : memref<6x64x64xbf16, #tpu.memory_space<vmem>>, vector<1x16x6xbf16>
    %2 = vector.shape_cast %1 : vector<1x16x6xbf16> to vector<16x6xbf16>
    %c0_4 = arith.constant 0 : index
    %c0_5 = arith.constant 0 : index
    %c0_6 = arith.constant 0 : index
    %3 = vector.load %arg3[%c0_4, %c0_5, %c0_6] : memref<6x64x1xf32, #tpu.memory_space<vmem>>, vector<1x16x1xf32>
    %4 = vector.shape_cast %3 : vector<1x16x1xf32> to vector<16x1xf32>
    %cst = arith.constant dense<0.000000e+00> : vector<16x128xf32>
    %5 = tpu.matmul %2, %0, %cst {dimension_numbers = #tpu.dot_dimension_numbers<[1], [0], [0], [1], [0, 0, 1, 1], [], []>} : vector<16x6xbf16>, vector<6x128xbf16>, vector<16x128xf32> -> vector<16x128xf32>
    %6 = vector.broadcast %4 : vector<16x1xf32> to vector<16x128xf32>
    %7 = arith.addf %5, %6 : vector<16x128xf32>
    %cst_7 = arith.constant 0.000000e+00 : f32
    %8 = vector.broadcast %cst_7 : f32 to vector<16x128xf32>
    %9 = arith.maximumf %7, %8 : vector<16x128xf32>
    %10 = arith.truncf %9 : vector<16x128xf32> to vector<16x128xbf16>
    %c1 = arith.constant 1 : index
    %c0_8 = arith.constant 0 : index
    %c0_9 = arith.constant 0 : index
    %11 = vector.load %arg2[%c1, %c0_8, %c0_9] : memref<6x64x64xbf16, #tpu.memory_space<vmem>>, vector<1x32x16xbf16>
    %12 = vector.shape_cast %11 : vector<1x32x16xbf16> to vector<32x16xbf16>
    %c1_10 = arith.constant 1 : index
    %c0_11 = arith.constant 0 : index
    %c0_12 = arith.constant 0 : index
    %13 = vector.load %arg3[%c1_10, %c0_11, %c0_12] : memref<6x64x1xf32, #tpu.memory_space<vmem>>, vector<1x32x1xf32>
    %14 = vector.shape_cast %13 : vector<1x32x1xf32> to vector<32x1xf32>
    %cst_13 = arith.constant dense<0.000000e+00> : vector<32x128xf32>
    %15 = tpu.matmul %12, %10, %cst_13 {dimension_numbers = #tpu.dot_dimension_numbers<[1], [0], [0], [1], [0, 0, 1, 1], [], []>} : vector<32x16xbf16>, vector<16x128xbf16>, vector<32x128xf32> -> vector<32x128xf32>
    %16 = vector.broadcast %14 : vector<32x1xf32> to vector<32x128xf32>
    %17 = arith.addf %15, %16 : vector<32x128xf32>
    %cst_14 = arith.constant 0.000000e+00 : f32
    %18 = vector.broadcast %cst_14 : f32 to vector<32x128xf32>
    %19 = arith.maximumf %17, %18 : vector<32x128xf32>
    %20 = arith.truncf %19 : vector<32x128xf32> to vector<32x128xbf16>
    %c2 = arith.constant 2 : index
    %c0_15 = arith.constant 0 : index
    %c0_16 = arith.constant 0 : index
    %21 = vector.load %arg2[%c2, %c0_15, %c0_16] : memref<6x64x64xbf16, #tpu.memory_space<vmem>>, vector<1x64x32xbf16>
    %22 = vector.shape_cast %21 : vector<1x64x32xbf16> to vector<64x32xbf16>
    %c2_17 = arith.constant 2 : index
    %c0_18 = arith.constant 0 : index
    %c0_19 = arith.constant 0 : index
    %23 = vector.load %arg3[%c2_17, %c0_18, %c0_19] : memref<6x64x1xf32, #tpu.memory_space<vmem>>, vector<1x64x1xf32>
    %24 = vector.shape_cast %23 : vector<1x64x1xf32> to vector<64x1xf32>
    %cst_20 = arith.constant dense<0.000000e+00> : vector<64x128xf32>
    %25 = tpu.matmul %22, %20, %cst_20 {dimension_numbers = #tpu.dot_dimension_numbers<[1], [0], [0], [1], [0, 0, 1, 1], [], []>} : vector<64x32xbf16>, vector<32x128xbf16>, vector<64x128xf32> -> vector<64x128xf32>
    %26 = vector.broadcast %24 : vector<64x1xf32> to vector<64x128xf32>
    %27 = arith.addf %25, %26 : vector<64x128xf32>
    %cst_21 = arith.constant 0.000000e+00 : f32
    %28 = vector.broadcast %cst_21 : f32 to vector<64x128xf32>
    %29 = arith.maximumf %27, %28 : vector<64x128xf32>
    %30 = arith.truncf %29 : vector<64x128xf32> to vector<64x128xbf16>
    %c3 = arith.constant 3 : index
    %c0_22 = arith.constant 0 : index
    %c0_23 = arith.constant 0 : index
    %31 = vector.load %arg2[%c3, %c0_22, %c0_23] : memref<6x64x64xbf16, #tpu.memory_space<vmem>>, vector<1x32x64xbf16>
    %32 = vector.shape_cast %31 : vector<1x32x64xbf16> to vector<32x64xbf16>
    %c3_24 = arith.constant 3 : index
    %c0_25 = arith.constant 0 : index
    %c0_26 = arith.constant 0 : index
    %33 = vector.load %arg3[%c3_24, %c0_25, %c0_26] : memref<6x64x1xf32, #tpu.memory_space<vmem>>, vector<1x32x1xf32>
    %34 = vector.shape_cast %33 : vector<1x32x1xf32> to vector<32x1xf32>
    %cst_27 = arith.constant dense<0.000000e+00> : vector<32x128xf32>
    %35 = tpu.matmul %32, %30, %cst_27 {dimension_numbers = #tpu.dot_dimension_numbers<[1], [0], [0], [1], [0, 0, 1, 1], [], []>} : vector<32x64xbf16>, vector<64x128xbf16>, vector<32x128xf32> -> vector<32x128xf32>
    %36 = vector.broadcast %34 : vector<32x1xf32> to vector<32x128xf32>
    %37 = arith.addf %35, %36 : vector<32x128xf32>
    %cst_28 = arith.constant 0.000000e+00 : f32
    %38 = vector.broadcast %cst_28 : f32 to vector<32x128xf32>
    %39 = arith.maximumf %37, %38 : vector<32x128xf32>
    %40 = arith.truncf %39 : vector<32x128xf32> to vector<32x128xbf16>
    %c4 = arith.constant 4 : index
    %c0_29 = arith.constant 0 : index
    %c0_30 = arith.constant 0 : index
    %41 = vector.load %arg2[%c4, %c0_29, %c0_30] : memref<6x64x64xbf16, #tpu.memory_space<vmem>>, vector<1x16x32xbf16>
    %42 = vector.shape_cast %41 : vector<1x16x32xbf16> to vector<16x32xbf16>
    %c4_31 = arith.constant 4 : index
    %c0_32 = arith.constant 0 : index
    %c0_33 = arith.constant 0 : index
    %43 = vector.load %arg3[%c4_31, %c0_32, %c0_33] : memref<6x64x1xf32, #tpu.memory_space<vmem>>, vector<1x16x1xf32>
    %44 = vector.shape_cast %43 : vector<1x16x1xf32> to vector<16x1xf32>
    %cst_34 = arith.constant dense<0.000000e+00> : vector<16x128xf32>
    %45 = tpu.matmul %42, %40, %cst_34 {dimension_numbers = #tpu.dot_dimension_numbers<[1], [0], [0], [1], [0, 0, 1, 1], [], []>} : vector<16x32xbf16>, vector<32x128xbf16>, vector<16x128xf32> -> vector<16x128xf32>
    %46 = vector.broadcast %44 : vector<16x1xf32> to vector<16x128xf32>
    %47 = arith.addf %45, %46 : vector<16x128xf32>
    %cst_35 = arith.constant 0.000000e+00 : f32
    %48 = vector.broadcast %cst_35 : f32 to vector<16x128xf32>
    %49 = arith.maximumf %47, %48 : vector<16x128xf32>
    %50 = arith.truncf %49 : vector<16x128xf32> to vector<16x128xbf16>
    %c5 = arith.constant 5 : index
    %c0_36 = arith.constant 0 : index
    %c0_37 = arith.constant 0 : index
    %51 = vector.load %arg2[%c5, %c0_36, %c0_37] : memref<6x64x64xbf16, #tpu.memory_space<vmem>>, vector<1x16x16xbf16>
    %52 = vector.shape_cast %51 : vector<1x16x16xbf16> to vector<16x16xbf16>
    %c5_38 = arith.constant 5 : index
    %c0_39 = arith.constant 0 : index
    %c0_40 = arith.constant 0 : index
    %53 = vector.load %arg3[%c5_38, %c0_39, %c0_40] : memref<6x64x1xf32, #tpu.memory_space<vmem>>, vector<1x16x1xf32>
    %54 = vector.shape_cast %53 : vector<1x16x1xf32> to vector<16x1xf32>
    %cst_41 = arith.constant dense<0.000000e+00> : vector<16x128xf32>
    %55 = tpu.matmul %52, %50, %cst_41 {dimension_numbers = #tpu.dot_dimension_numbers<[1], [0], [0], [1], [0, 0, 1, 1], [], []>} : vector<16x16xbf16>, vector<16x128xbf16>, vector<16x128xf32> -> vector<16x128xf32>
    %56 = vector.broadcast %54 : vector<16x1xf32> to vector<16x128xf32>
    %57 = arith.addf %55, %56 : vector<16x128xf32>
    %58 = vector.extract_strided_slice %57 {offsets = [0, 0], sizes = [2, 128], strides = [1, 1]} : vector<16x128xf32> to vector<2x128xf32>
    %59 = arith.negf %58 : vector<2x128xf32>
    %60 = math.exp %59 : vector<2x128xf32>
    %cst_42 = arith.constant 1.000000e+00 : f32
    %61 = vector.broadcast %cst_42 : f32 to vector<2x128xf32>
    %62 = arith.addf %61, %60 : vector<2x128xf32>
    %63 = arith.divf %61, %62 : vector<2x128xf32>
    %c0_43 = arith.constant 0 : index
    %c0_44 = arith.constant 0 : index
    %64 = vector.load %arg4[%c0_43, %c0_44] : memref<2x128xf32, #tpu.memory_space<vmem>>, vector<2x128xf32>
    tpu.vector_store %arg4[%c0_43, %c0_44], %63 {strides = array<i32>} : memref<2x128xf32, #tpu.memory_space<vmem>>, vector<2x128xf32>,
    return
  }
  func.func @transform_0(%arg0: i32) -> (i32, i32) {
    %c0_i32 = arith.constant 0 : i32
    %c0_i32_0 = arith.constant 0 : i32
    return %c0_i32, %arg0 : i32, i32
  }
  func.func @transform_1(%arg0: i32) -> (i32, i32, i32) {
    %c0_i32 = arith.constant 0 : i32
    %c0_i32_0 = arith.constant 0 : i32
    %c0_i32_1 = arith.constant 0 : i32
    %c0_i32_2 = arith.constant 0 : i32
    return %c0_i32, %c0_i32_0, %c0_i32_1 : i32, i32, i32
  }
  func.func @transform_2(%arg0: i32) -> (i32, i32, i32) {
    %c0_i32 = arith.constant 0 : i32
    %c0_i32_0 = arith.constant 0 : i32
    %c0_i32_1 = arith.constant 0 : i32
    %c0_i32_2 = arith.constant 0 : i32
    return %c0_i32, %c0_i32_0, %c0_i32_1 : i32, i32, i32
  }
  func.func @transform_3(%arg0: i32) -> (i32, i32) {
    %c0_i32 = arith.constant 0 : i32
    %c0_i32_0 = arith.constant 0 : i32
    return %c0_i32, %arg0 : i32, i32
  }
}

</mosaic_0001>

<llo_original>
// kernel: tpu_custom_call.1
$region0: #{tpu_custom_call.1}
  #allocation0 [shape = 'u32[]', space=smem, size = 0x4, offset = 0x4, fixed_abs, tag = 'smem constant byte address 0x4 - core index']
  #allocation1 [shape = 'u32[144,128]{1,0:T(1,128)}', space=vmem, size = 0x12000, scoped, tag = 'internal scratch']
  %s0 = inlined_call_operand.vmem [shape: bf16[6,128], index: 0, kind: input, shape index: {}]
  %s1 = inlined_call_operand.vmem [shape: bf16[6,64,64], index: 1, kind: input, shape index: {}]
  %s2 = inlined_call_operand.vmem [shape: f32[6,64,1], index: 2, kind: input, shape index: {}]
  %s3 = inlined_call_operand.hbm [shape: f32[2,128], index: 3, kind: output, shape index: {}]
  %s4 = sld [smem:[#allocation0]]
  $region22: #{tpu_custom_call.1} parent=0
    _
  %s6 = ssub.s32 1, %s4
  %s7 = scalar_select 0, %s6, %s4
  $region1: #{tpu_custom_call.1} parent=0
    #allocation2 [shape = 'u8[1024]{0}', space=vmem, size = 0x400, scoped, tag = 'output window, operand 0, single buffered']
    #allocation3 [shape = 's32[1]{0}', space=sflag, size = 0x4, scoped, tag = 'scoped memory for tpu_custom_call.1']
    %8 = vsyncpa [#allocation3], 0
    // Predicated region
    $region2: #{tpu_custom_call.1} parent=1 // pred_check
      _
    $region3: #{tpu_custom_call.1} parent=1 // pred_check_branch
      %10 = sbr.rel (0) target = $region5
    $region4: #{tpu_custom_call.1} parent=1 // pred_region
      _
    $region5: #{tpu_custom_call.1} parent=1 // pred_fallthru
      _
    // Predicated region
    $region6: #{tpu_custom_call.1} parent=1 // pred_check
      _
    $region7: #{tpu_custom_call.1} parent=1 // pred_check_branch
      %12 = sbr.rel (0) target = $region9
    $region8: #{tpu_custom_call.1} parent=1 // pred_region
      _
    $region9: #{tpu_custom_call.1} parent=1 // pred_fallthru
      _
    // Predicated region
    $region10: #{tpu_custom_call.1} parent=1 // pred_check
      _
    $region11: #{tpu_custom_call.1} parent=1 // pred_check_branch
      %14 = sbr.rel (0) target = $region13
    $region12: #{tpu_custom_call.1} parent=1 // pred_region
      _
    $region13: #{tpu_custom_call.1} parent=1 // pred_fallthru
      _
    %v16 = vld [vmem:[%s0] sm:$0x7]
    %v17 = vld [vmem:[%s1] sm:$0xf]
    %v18 = vld [vmem:[%s1 + $0x4] sm:$0xf]
    %v19 = vld [vmem:[%s2] sm:$0xff]
    %v20 = vld [vmem:[%s2 + $0x8] sm:$0xff]
    %22 = vset.pattern.permute.xlu0 0
    %23 = vperm.xlu0 %22, %v19
    %v24 = vpop.permute.xlu0 %23
    %27 = vset.pattern.permute.xlu0 0
    %28 = vperm.xlu0 %27, %v20
    %v29 = vpop.permute.xlu0 %28
    %v33 = vunpack.c.l.b16 %v17
    %v34 = vunpack.c.l.b16 %v18
    %v35 = vpack.c.b16 %v34, %v33
    %vm36 = vcmask 48128
    %v38 = vsel %vm36, %v35, 0
    %vm40 = vcmask 1042432
    %v42 = vsel %vm40, %v16, 0
    %44 = vmatprep.subr.bf16.mxu0 0
    %45 = vmatpush1.bf16.msra.mxu0 %v42
    %46 = vmatprep.subr.bf16.mxu0 0
    %47 = vmatpush1.bf16.msra.mxu0 0
    %48 = vmatprep.subr.bf16.mxu0 0
    %49 = vmatpush1.bf16.msra.mxu0 0
    %50 = vmatprep.subr.bf16.mxu0 0
    %51 = vmatpush1.bf16.msra.mxu0 0
    %52 = vmatprep.subr.bf16.mxu0 0
    %53 = vmatpush1.bf16.msra.mxu0 0
    %54 = vmatprep.subr.bf16.mxu0 0
    %55 = vmatpush1.bf16.msra.mxu0 0
    %56 = vmatprep.subr.bf16.mxu0 0
    %57 = vmatpush1.bf16.msra.mxu0 0
    %58 = vmatprep.subr.bf16.mxu0 0
    %59 = vmatpush1.bf16.msra.mxu0 0
    %60 = vmatprep.subr.bf16.mxu0 0
    %61 = vmatpush1.bf16.msra.mxu0 0
    %62 = vmatprep.subr.bf16.mxu0 0
    %63 = vmatpush1.bf16.msra.mxu0 0
    %64 = vmatprep.subr.bf16.mxu0 0
    %65 = vmatpush1.bf16.msra.mxu0 0
    %66 = vmatprep.subr.bf16.mxu0 0
    %67 = vmatpush1.bf16.msra.mxu0 0
    %68 = vmatprep.subr.bf16.mxu0 0
    %69 = vmatpush1.bf16.msra.mxu0 0
    %70 = vmatprep.subr.bf16.mxu0 0
    %71 = vmatpush1.bf16.msra.mxu0 0
    %72 = vmatprep.subr.bf16.mxu0 0
    %73 = vmatpush1.bf16.msra.mxu0 0
    %74 = vmatprep.subr.bf16.mxu0 0
    %75 = vmatpush1.bf16.msra.mxu0 0
    %76 = vmatprep.mubr.bf16.mxu0 0
    %77 = vmatmul.mubr.bf16.gmra.mrb[0].mxu0 %v38
    %v78 = vpop.f32.mrb[0].mxu0
    %v79 = vadd.f32 %v24, %v78
    %v80 = vpop.f32.mrb[0].mxu0
    %v81 = vpop.f32.mrb[0].mxu0
    %v82 = vadd.f32 %v29, %v81
    %v83 = vpop.f32.mrb[0].mxu0
    %84 = vdwg.mxu0
    %v85 = vmax.f32 %v79, 0.0
    %v86 = vmax.f32 %v82, 0.0
    %v87 = vpack.c.bf16 %v86, %v85
    %s88 = scalar_lea.vmem %s1, 32
    %v89 = vld [vmem:[%s88] sm:$0xf]
    %v90 = vld [vmem:[%s88 + $0x4] sm:$0xf]
    %v91 = vld [vmem:[%s88 + $0x8] sm:$0xf]
    %v92 = vld [vmem:[%s88 + $0xc] sm:$0xf]
    %s93 = scalar_lea.vmem %s2, 64
    %v94 = vld [vmem:[%s93] sm:$0xff]
    %v95 = vld [vmem:[%s93 + $0x8] sm:$0xff]
    %v96 = vld [vmem:[%s93 + $0x10] sm:$0xff]
    %v97 = vld [vmem:[%s93 + $0x18] sm:$0xff]
    %99 = vset.pattern.permute.xlu0 0
    %100 = vperm.xlu0 %99, %v94
    %v101 = vpop.permute.xlu0 %100
    %104 = vset.pattern.permute.xlu0 0
    %105 = vperm.xlu0 %104, %v95
    %v106 = vpop.permute.xlu0 %105
    %109 = vset.pattern.permute.xlu0 0
    %110 = vperm.xlu0 %109, %v96
    %v111 = vpop.permute.xlu0 %110
    %114 = vset.pattern.permute.xlu0 0
    %115 = vperm.xlu0 %114, %v97
    %v116 = vpop.permute.xlu0 %115
    %v122 = vunpack.c.l.b16 %v89
    %v123 = vunpack.c.l.b16 %v90
    %v124 = vunpack.c.l.b16 %v91
    %v125 = vunpack.c.l.b16 %v92
    %v126 = vpack.c.b16 %v123, %v122
    %v127 = vpack.c.b16 %v125, %v124
    %vm128 = vcmask 130048
    %v130 = vsel %vm128, %v126, 0
    %v133 = vsel %vm128, %v127, 0
    %135 = vmatprep.subr.bf16.mxu0 0
    %136 = vmatpush1.bf16.msra.mxu0 %v87
    %137 = vmatprep.subr.bf16.mxu0 0
    %138 = vmatpush1.bf16.msra.mxu0 0
    %139 = vmatprep.subr.bf16.mxu0 0
    %140 = vmatpush1.bf16.msra.mxu0 0
    %141 = vmatprep.subr.bf16.mxu0 0
    %142 = vmatpush1.bf16.msra.mxu0 0
    %143 = vmatprep.subr.bf16.mxu0 0
    %144 = vmatpush1.bf16.msra.mxu0 0
    %145 = vmatprep.subr.bf16.mxu0 0
    %146 = vmatpush1.bf16.msra.mxu0 0
    %147 = vmatprep.subr.bf16.mxu0 0
    %148 = vmatpush1.bf16.msra.mxu0 0
    %149 = vmatprep.subr.bf16.mxu0 0
    %150 = vmatpush1.bf16.msra.mxu0 0
    %151 = vmatprep.subr.bf16.mxu0 0
    %152 = vmatpush1.bf16.msra.mxu0 0
    %153 = vmatprep.subr.bf16.mxu0 0
    %154 = vmatpush1.bf16.msra.mxu0 0
    %155 = vmatprep.subr.bf16.mxu0 0
    %156 = vmatpush1.bf16.msra.mxu0 0
    %157 = vmatprep.subr.bf16.mxu0 0
    %158 = vmatpush1.bf16.msra.mxu0 0
    %159 = vmatprep.subr.bf16.mxu0 0
    %160 = vmatpush1.bf16.msra.mxu0 0
    %161 = vmatprep.subr.bf16.mxu0 0
    %162 = vmatpush1.bf16.msra.mxu0 0
    %163 = vmatprep.subr.bf16.mxu0 0
    %164 = vmatpush1.bf16.msra.mxu0 0
    %165 = vmatprep.subr.bf16.mxu0 0
    %166 = vmatpush1.bf16.msra.mxu0 0
    %167 = vmatprep.mubr.bf16.mxu0 0
    %168 = vmatmul.mubr.bf16.gmra.mrb[0].mxu0 %v130
    %v169 = vpop.f32.mrb[0].mxu0
    %v170 = vadd.f32 %v101, %v169
    %v171 = vpop.f32.mrb[0].mxu0
    %v172 = vpop.f32.mrb[0].mxu0
    %v173 = vadd.f32 %v106, %v172
    %v174 = vpop.f32.mrb[0].mxu0
    %175 = vmatprep.mubr.bf16.mxu0 0
    %176 = vmatmul.mubr.bf16.gmra.mrb[0].mxu0 %v133
    %v177 = vpop.f32.mrb[0].mxu0
    %v178 = vadd.f32 %v111, %v177
    %v179 = vpop.f32.mrb[0].mxu0
    %v180 = vpop.f32.mrb[0].mxu0
    %v181 = vadd.f32 %v116, %v180
    %v182 = vpop.f32.mrb[0].mxu0
    %183 = vdwg.mxu0
    %v184 = vmax.f32 %v170, 0.0
    %v185 = vmax.f32 %v173, 0.0
    %v186 = vmax.f32 %v178, 0.0
    %v187 = vmax.f32 %v181, 0.0
    %v188 = vpack.c.bf16 %v185, %v184
    %v189 = vpack.c.bf16 %v187, %v186
    %s190 = scalar_lea.vmem %s1, 64
    %v191 = vld [vmem:[%s190] sm:$0xf]
    %v192 = vld [vmem:[%s190 + $0x4] sm:$0xf]
    %v193 = vld [vmem:[%s190 + $0x8] sm:$0xf]
    %v194 = vld [vmem:[%s190 + $0xc] sm:$0xf]
    %v195 = vld [vmem:[%s190 + $0x10] sm:$0xf]
    %v196 = vld [vmem:[%s190 + $0x14] sm:$0xf]
    %v197 = vld [vmem:[%s190 + $0x18] sm:$0xf]
    %v198 = vld [vmem:[%s190 + $0x1c] sm:$0xf]
    %s199 = scalar_lea.vmem %s2, 128
    %v200 = vld [vmem:[%s199] sm:$0xff]
    %v201 = vld [vmem:[%s199 + $0x8] sm:$0xff]
    %v202 = vld [vmem:[%s199 + $0x10] sm:$0xff]
    %v203 = vld [vmem:[%s199 + $0x18] sm:$0xff]
    %v204 = vld [vmem:[%s199 + $0x20] sm:$0xff]
    %v205 = vld [vmem:[%s199 + $0x28] sm:$0xff]
    %v206 = vld [vmem:[%s199 + $0x30] sm:$0xff]
    %v207 = vld [vmem:[%s199 + $0x38] sm:$0xff]
    %209 = vset.pattern.permute.xlu0 0
    %210 = vperm.xlu0 %209, %v200
    %v211 = vpop.permute.xlu0 %210
    %214 = vset.pattern.permute.xlu0 0
    %215 = vperm.xlu0 %214, %v201
    %v216 = vpop.permute.xlu0 %215
    %219 = vset.pattern.permute.xlu0 0
    %220 = vperm.xlu0 %219, %v202
    %v221 = vpop.permute.xlu0 %220
    %224 = vset.pattern.permute.xlu0 0
    %225 = vperm.xlu0 %224, %v203
    %v226 = vpop.permute.xlu0 %225
    %229 = vset.pattern.permute.xlu0 0
    %230 = vperm.xlu0 %229, %v204
    %v231 = vpop.permute.xlu0 %230
    %234 = vset.pattern.permute.xlu0 0
    %235 = vperm.xlu0 %234, %v205
    %v236 = vpop.permute.xlu0 %235
    %239 = vset.pattern.permute.xlu0 0
    %240 = vperm.xlu0 %239, %v206
    %v241 = vpop.permute.xlu0 %240
    %244 = vset.pattern.permute.xlu0 0
    %245 = vperm.xlu0 %244, %v207
    %v246 = vpop.permute.xlu0 %245
    %v256 = vunpack.c.l.b16 %v191
    %v257 = vunpack.c.l.b16 %v192
    %v258 = vunpack.c.l.b16 %v193
    %v259 = vunpack.c.l.b16 %v194
    %v260 = vunpack.c.l.b16 %v195
    %v261 = vunpack.c.l.b16 %v196
    %v262 = vunpack.c.l.b16 %v197
    %v263 = vunpack.c.l.b16 %v198
    %v264 = vpack.c.b16 %v257, %v256
    %v265 = vpack.c.b16 %v259, %v258
    %v266 = vpack.c.b16 %v261, %v260
    %v267 = vpack.c.b16 %v263, %v262
    %vm268 = vcmask 261120
    %v270 = vsel %vm268, %v264, 0
    %v273 = vsel %vm268, %v265, 0
    %v276 = vsel %vm268, %v266, 0
    %v279 = vsel %vm268, %v267, 0
    %281 = vmatprep.subr.bf16.mxu0 0
    %282 = vmatpush1.bf16.msra.mxu0 %v188
    %283 = vmatprep.subr.bf16.mxu0 0
    %284 = vmatpush1.bf16.msra.mxu0 %v189
    %285 = vmatprep.subr.bf16.mxu0 0
    %286 = vmatpush1.bf16.msra.mxu0 0
    %287 = vmatprep.subr.bf16.mxu0 0
    %288 = vmatpush1.bf16.msra.mxu0 0
    %289 = vmatprep.subr.bf16.mxu0 0
    %290 = vmatpush1.bf16.msra.mxu0 0
    %291 = vmatprep.subr.bf16.mxu0 0
    %292 = vmatpush1.bf16.msra.mxu0 0
    %293 = vmatprep.subr.bf16.mxu0 0
    %294 = vmatpush1.bf16.msra.mxu0 0
    %295 = vmatprep.subr.bf16.mxu0 0
    %296 = vmatpush1.bf16.msra.mxu0 0
    %297 = vmatprep.subr.bf16.mxu0 0
    %298 = vmatpush1.bf16.msra.mxu0 0
    %299 = vmatprep.subr.bf16.mxu0 0
    %300 = vmatpush1.bf16.msra.mxu0 0
    %301 = vmatprep.subr.bf16.mxu0 0
    %302 = vmatpush1.bf16.msra.mxu0 0
    %303 = vmatprep.subr.bf16.mxu0 0
    %304 = vmatpush1.bf16.msra.mxu0 0
    %305 = vmatprep.subr.bf16.mxu0 0
    %306 = vmatpush1.bf16.msra.mxu0 0
    %307 = vmatprep.subr.bf16.mxu0 0
    %308 = vmatpush1.bf16.msra.mxu0 0
    %309 = vmatprep.subr.bf16.mxu0 0
    %310 = vmatpush1.bf16.msra.mxu0 0
    %311 = vmatprep.subr.bf16.mxu0 0
    %312 = vmatpush1.bf16.msra.mxu0 0
    %313 = vmatprep.mubr.bf16.mxu0 0
    %314 = vmatmul.mubr.bf16.gmra.mrb[0].mxu0 %v270
    %v315 = vpop.f32.mrb[0].mxu0
    %v316 = vadd.f32 %v211, %v315
    %v317 = vpop.f32.mrb[0].mxu0
    %v318 = vpop.f32.mrb[0].mxu0
    %v319 = vadd.f32 %v216, %v318
    %v320 = vpop.f32.mrb[0].mxu0
    %321 = vmatprep.mubr.bf16.mxu0 0
    %322 = vmatmul.mubr.bf16.gmra.mrb[0].mxu0 %v273
    %v323 = vpop.f32.mrb[0].mxu0
    %v324 = vadd.f32 %v221, %v323
    %v325 = vpop.f32.mrb[0].mxu0
    %v326 = vpop.f32.mrb[0].mxu0
    %v327 = vadd.f32 %v226, %v326
    %v328 = vpop.f32.mrb[0].mxu0
    %329 = vmatprep.mubr.bf16.mxu0 0
    %330 = vmatmul.mubr.bf16.gmra.mrb[0].mxu0 %v276
    %v331 = vpop.f32.mrb[0].mxu0
    %v332 = vadd.f32 %v231, %v331
    %v333 = vpop.f32.mrb[0].mxu0
    %v334 = vpop.f32.mrb[0].mxu0
    %v335 = vadd.f32 %v236, %v334
    %v336 = vpop.f32.mrb[0].mxu0
    %337 = vmatprep.mubr.bf16.mxu0 0
    %338 = vmatmul.mubr.bf16.gmra.mrb[0].mxu0 %v279
    %v339 = vpop.f32.mrb[0].mxu0
    %v340 = vadd.f32 %v241, %v339
    %v341 = vpop.f32.mrb[0].mxu0
    %v342 = vpop.f32.mrb[0].mxu0
    %v343 = vadd.f32 %v246, %v342
    %v344 = vpop.f32.mrb[0].mxu0
    %345 = vdwg.mxu0
    %v346 = vmax.f32 %v316, 0.0
    %v347 = vmax.f32 %v319, 0.0
    %v348 = vmax.f32 %v324, 0.0
    %v349 = vmax.f32 %v327, 0.0
    %v350 = vmax.f32 %v332, 0.0
    %v351 = vmax.f32 %v335, 0.0
    %v352 = vmax.f32 %v340, 0.0
    %v353 = vmax.f32 %v343, 0.0
    %v354 = vpack.c.bf16 %v347, %v346
    %v355 = vpack.c.bf16 %v349, %v348
    %v356 = vpack.c.bf16 %v351, %v350
    %v357 = vpack.c.bf16 %v353, %v352
    %s358 = scalar_lea.vmem %s1, 96
    %v359 = vld [vmem:[%s358] sm:$0xf]
    %v360 = vld [vmem:[%s358 + $0x4] sm:$0xf]
    %v361 = vld [vmem:[%s358 + $0x8] sm:$0xf]
    %v362 = vld [vmem:[%s358 + $0xc] sm:$0xf]
    %s363 = scalar_lea.vmem %s2, 192
    %v364 = vld [vmem:[%s363] sm:$0xff]
    %v365 = vld [vmem:[%s363 + $0x8] sm:$0xff]
    %v366 = vld [vmem:[%s363 + $0x10] sm:$0xff]
    %v367 = vld [vmem:[%s363 + $0x18] sm:$0xff]
    %369 = vset.pattern.permute.xlu0 0
    %370 = vperm.xlu0 %369, %v364
    %v371 = vpop.permute.xlu0 %370
    %374 = vset.pattern.permute.xlu0 0
    %375 = vperm.xlu0 %374, %v365
    %v376 = vpop.permute.xlu0 %375
    %379 = vset.pattern.permute.xlu0 0
    %380 = vperm.xlu0 %379, %v366
    %v381 = vpop.permute.xlu0 %380
    %384 = vset.pattern.permute.xlu0 0
    %385 = vperm.xlu0 %384, %v367
    %v386 = vpop.permute.xlu0 %385
    %v392 = vunpack.c.l.b16 %v359
    %v393 = vunpack.c.l.b16 %v360
    %v394 = vunpack.c.l.b16 %v361
    %v395 = vunpack.c.l.b16 %v362
    %v396 = vpack.c.b16 %v393, %v392
    %v397 = vpack.c.b16 %v395, %v394
    %vm398 = vcmask 523264
    %v400 = vsel %vm398, %v396, 0
    %v403 = vsel %vm398, %v397, 0
    %405 = vmatprep.subr.bf16.mxu0 0
    %406 = vmatpush1.bf16.msra.mxu0 %v354
    %407 = vmatprep.subr.bf16.mxu0 0
    %408 = vmatpush1.bf16.msra.mxu0 %v355
    %409 = vmatprep.subr.bf16.mxu0 0
    %410 = vmatpush1.bf16.msra.mxu0 %v356
    %411 = vmatprep.subr.bf16.mxu0 0
    %412 = vmatpush1.bf16.msra.mxu0 %v357
    %413 = vmatprep.subr.bf16.mxu0 0
    %414 = vmatpush1.bf16.msra.mxu0 0
    %415 = vmatprep.subr.bf16.mxu0 0
    %416 = vmatpush1.bf16.msra.mxu0 0
    %417 = vmatprep.subr.bf16.mxu0 0
    %418 = vmatpush1.bf16.msra.mxu0 0
    %419 = vmatprep.subr.bf16.mxu0 0
    %420 = vmatpush1.bf16.msra.mxu0 0
    %421 = vmatprep.subr.bf16.mxu0 0
    %422 = vmatpush1.bf16.msra.mxu0 0
    %423 = vmatprep.subr.bf16.mxu0 0
    %424 = vmatpush1.bf16.msra.mxu0 0
    %425 = vmatprep.subr.bf16.mxu0 0
    %426 = vmatpush1.bf16.msra.mxu0 0
    %427 = vmatprep.subr.bf16.mxu0 0
    %428 = vmatpush1.bf16.msra.mxu0 0
    %429 = vmatprep.subr.bf16.mxu0 0
    %430 = vmatpush1.bf16.msra.mxu0 0
    %431 = vmatprep.subr.bf16.mxu0 0
    %432 = vmatpush1.bf16.msra.mxu0 0
    %433 = vmatprep.subr.bf16.mxu0 0
    %434 = vmatpush1.bf16.msra.mxu0 0
    %435 = vmatprep.subr.bf16.mxu0 0
    %436 = vmatpush1.bf16.msra.mxu0 0
    %437 = vmatprep.mubr.bf16.mxu0 0
    %438 = vmatmul.mubr.bf16.gmra.mrb[0].mxu0 %v400
    %v439 = vpop.f32.mrb[0].mxu0
    %v440 = vadd.f32 %v371, %v439
    %v441 = vpop.f32.mrb[0].mxu0
    %v442 = vpop.f32.mrb[0].mxu0
    %v443 = vadd.f32 %v376, %v442
    %v444 = vpop.f32.mrb[0].mxu0
    %445 = vmatprep.mubr.bf16.mxu0 0
    %446 = vmatmul.mubr.bf16.gmra.mrb[0].mxu0 %v403
    %v447 = vpop.f32.mrb[0].mxu0
    %v448 = vadd.f32 %v381, %v447
    %v449 = vpop.f32.mrb[0].mxu0
    %v450 = vpop.f32.mrb[0].mxu0
    %v451 = vadd.f32 %v386, %v450
    %v452 = vpop.f32.mrb[0].mxu0
    %453 = vdwg.mxu0
    %v454 = vmax.f32 %v440, 0.0
    %v455 = vmax.f32 %v443, 0.0
    %v456 = vmax.f32 %v448, 0.0
    %v457 = vmax.f32 %v451, 0.0
    %v458 = vpack.c.bf16 %v455, %v454
    %v459 = vpack.c.bf16 %v457, %v456
    %s460 = scalar_lea.vmem %s1, 128
    %v461 = vld [vmem:[%s460] sm:$0xf]
    %v462 = vld [vmem:[%s460 + $0x4] sm:$0xf]
    %s463 = scalar_lea.vmem %s2, 256
    %v464 = vld [vmem:[%s463] sm:$0xff]
    %v465 = vld [vmem:[%s463 + $0x8] sm:$0xff]
    %467 = vset.pattern.permute.xlu0 0
    %468 = vperm.xlu0 %467, %v464
    %v469 = vpop.permute.xlu0 %468
    %472 = vset.pattern.permute.xlu0 0
    %473 = vperm.xlu0 %472, %v465
    %v474 = vpop.permute.xlu0 %473
    %v478 = vunpack.c.l.b16 %v461
    %v479 = vunpack.c.l.b16 %v462
    %v480 = vpack.c.b16 %v479, %v478
    %v482 = vsel %vm268, %v480, 0
    %484 = vmatprep.subr.bf16.mxu0 0
    %485 = vmatpush1.bf16.msra.mxu0 %v458
    %486 = vmatprep.subr.bf16.mxu0 0
    %487 = vmatpush1.bf16.msra.mxu0 %v459
    %488 = vmatprep.subr.bf16.mxu0 0
    %489 = vmatpush1.bf16.msra.mxu0 0
    %490 = vmatprep.subr.bf16.mxu0 0
    %491 = vmatpush1.bf16.msra.mxu0 0
    %492 = vmatprep.subr.bf16.mxu0 0
    %493 = vmatpush1.bf16.msra.mxu0 0
    %494 = vmatprep.subr.bf16.mxu0 0
    %495 = vmatpush1.bf16.msra.mxu0 0
    %496 = vmatprep.subr.bf16.mxu0 0
    %497 = vmatpush1.bf16.msra.mxu0 0
    %498 = vmatprep.subr.bf16.mxu0 0
    %499 = vmatpush1.bf16.msra.mxu0 0
    %500 = vmatprep.subr.bf16.mxu0 0
    %501 = vmatpush1.bf16.msra.mxu0 0
    %502 = vmatprep.subr.bf16.mxu0 0
    %503 = vmatpush1.bf16.msra.mxu0 0
    %504 = vmatprep.subr.bf16.mxu0 0
    %505 = vmatpush1.bf16.msra.mxu0 0
    %506 = vmatprep.subr.bf16.mxu0 0
    %507 = vmatpush1.bf16.msra.mxu0 0
    %508 = vmatprep.subr.bf16.mxu0 0
    %509 = vmatpush1.bf16.msra.mxu0 0
    %510 = vmatprep.subr.bf16.mxu0 0
    %511 = vmatpush1.bf16.msra.mxu0 0
    %512 = vmatprep.subr.bf16.mxu0 0
    %513 = vmatpush1.bf16.msra.mxu0 0
    %514 = vmatprep.subr.bf16.mxu0 0
    %515 = vmatpush1.bf16.msra.mxu0 0
    %516 = vmatprep.mubr.bf16.mxu0 0
    %517 = vmatmul.mubr.bf16.gmra.mrb[0].mxu0 %v482
    %v518 = vpop.f32.mrb[0].mxu0
    %v519 = vadd.f32 %v469, %v518
    %v520 = vpop.f32.mrb[0].mxu0
    %v521 = vpop.f32.mrb[0].mxu0
    %v522 = vadd.f32 %v474, %v521
    %v523 = vpop.f32.mrb[0].mxu0
    %524 = vdwg.mxu0
    %v525 = vmax.f32 %v519, 0.0
    %v526 = vmax.f32 %v522, 0.0
    %v527 = vpack.c.bf16 %v526, %v525
    %s528 = scalar_lea.vmem %s1, 160
    %v529 = vld [vmem:[%s528] sm:$0xf]
    %v530 = vld [vmem:[%s528 + $0x4] sm:$0xf]
    %s531 = scalar_lea.vmem %s2, 320
    %v532 = vld [vmem:[%s531] sm:$0xff]
    %v533 = vld [vmem:[%s531 + $0x8] sm:$0xff]
    %535 = vset.pattern.permute.xlu0 0
    %536 = vperm.xlu0 %535, %v532
    %v537 = vpop.permute.xlu0 %536
    %540 = vset.pattern.permute.xlu0 0
    %541 = vperm.xlu0 %540, %v533
    %v542 = vpop.permute.xlu0 %541
    %v545 = vunpack.c.l.b16 %v529
    %v546 = vunpack.c.l.b16 %v530
    %v547 = vpack.c.b16 %v546, %v545
    %v549 = vsel %vm128, %v547, 0
    %551 = vmatprep.subr.bf16.mxu0 0
    %552 = vmatpush1.bf16.msra.mxu0 %v527
    %553 = vmatprep.subr.bf16.mxu0 0
    %554 = vmatpush1.bf16.msra.mxu0 0
    %555 = vmatprep.subr.bf16.mxu0 0
    %556 = vmatpush1.bf16.msra.mxu0 0
    %557 = vmatprep.subr.bf16.mxu0 0
    %558 = vmatpush1.bf16.msra.mxu0 0
    %559 = vmatprep.subr.bf16.mxu0 0
    %560 = vmatpush1.bf16.msra.mxu0 0
    %561 = vmatprep.subr.bf16.mxu0 0
    %562 = vmatpush1.bf16.msra.mxu0 0
    %563 = vmatprep.subr.bf16.mxu0 0
    %564 = vmatpush1.bf16.msra.mxu0 0
    %565 = vmatprep.subr.bf16.mxu0 0
    %566 = vmatpush1.bf16.msra.mxu0 0
    %567 = vmatprep.subr.bf16.mxu0 0
    %568 = vmatpush1.bf16.msra.mxu0 0
    %569 = vmatprep.subr.bf16.mxu0 0
    %570 = vmatpush1.bf16.msra.mxu0 0
    %571 = vmatprep.subr.bf16.mxu0 0
    %572 = vmatpush1.bf16.msra.mxu0 0
    %573 = vmatprep.subr.bf16.mxu0 0
    %574 = vmatpush1.bf16.msra.mxu0 0
    %575 = vmatprep.subr.bf16.mxu0 0
    %576 = vmatpush1.bf16.msra.mxu0 0
    %577 = vmatprep.subr.bf16.mxu0 0
    %578 = vmatpush1.bf16.msra.mxu0 0
    %579 = vmatprep.subr.bf16.mxu0 0
    %580 = vmatpush1.bf16.msra.mxu0 0
    %581 = vmatprep.subr.bf16.mxu0 0
    %582 = vmatpush1.bf16.msra.mxu0 0
    %583 = vmatprep.mubr.bf16.mxu0 0
    %584 = vmatmul.mubr.bf16.gmra.mrb[0].mxu0 %v549
    %v585 = vpop.f32.mrb[0].mxu0
    %v586 = vadd.f32 %v537, %v585
    %v587 = vpop.f32.mrb[0].mxu0
    %v588 = vpop.f32.mrb[0].mxu0
    %v589 = vpop.f32.mrb[0].mxu0
    %590 = vdwg.mxu0
    %v591 = vxor.u32 %v586, 2147483648
    %v592 = vmul.f32 %v591, 1.442695
    %v593 = vpow.pop %v592
    %v594 = vadd.f32 %v593, 1.0
    %v595 = vrcp.pop %v594
    %v596 = vmul.f32 1.0, %v595
    %597 = vst [vmem:[#allocation2] sm:$0x3] %v596
    // Predicated region
    $region14: #{tpu_custom_call.1} parent=1 // pred_check
      _
    $region15: #{tpu_custom_call.1} parent=1 // pred_check_branch
      %599 = sbr.rel (0) target = $region17
    $region16: #{tpu_custom_call.1} parent=1 // pred_region
      %s601 = ssub.s32 32, 32
      %602 = vsyncadd [#allocation3], %s601
      %s604 = sshll.u32 [#allocation2], 4
      %s605 = int_to_ptr.vmem [resolvable:$true] %s604
      %607 = dma.vmem_to_hbm [thread:$0]  %s605, 32, %s3, [#allocation3]
    $region17: #{tpu_custom_call.1} parent=1 // pred_fallthru
      _
    // Predicated region
    $region18: #{tpu_custom_call.1} parent=1 // pred_check
      _
    $region19: #{tpu_custom_call.1} parent=1 // pred_check_branch
      %609 = sbr.rel (0) target = $region21
    $region20: #{tpu_custom_call.1} parent=1 // pred_region
      %610 = dma.done [#allocation3], 32
    $region21: #{tpu_custom_call.1} parent=1 // pred_fallthru
      _
    %611 = vsyncpa [#allocation3], 1

</llo_original>
